<compile_context>
chip_gen: v7x
topology: tpu7x:2x2x1
jax: 0.10.0
libtpu: 0.0.40
codegen_flags: <defaults>
</compile_context>

<pallas_src>
import functools

import jax
import jax.numpy as jnp
from jax.experimental import pallas as pl
from jax.experimental.pallas import tpu as pltpu

_H1, _H2 = 400, 300          # torch hidden sizes
_H1P, _H2P = 512, 384        # 128-lane-aligned padded hidden sizes
_LANE = 128                  # lane-dense output slab width


def _round_up(n: int, m: int) -> int:
    return ((n + m - 1) // m) * m


def _pad2d(a, rows, cols):
    return jnp.pad(a, ((0, rows - a.shape[0]), (0, cols - a.shape[1])))


# ----------------------------------------------------------------------------
# Kernel
# ----------------------------------------------------------------------------
def _actor_kernel(x_ref, w1_ref, b1_ref, w2_ref, b2_ref, w3_ref, b3_ref,
                  out_ref, *, max_action):
    # x tile: (TB, state_dim) f32 -> bf16 operands on the MXU, f32 accumulate.
    x = x_ref[...].astype(jnp.bfloat16)

    h1 = jnp.dot(x, w1_ref[...], preferred_element_type=jnp.float32)
    h1 = jnp.maximum(h1 + b1_ref[...], 0.0)                       # (TB, 512) f32

    h2 = jnp.dot(h1.astype(jnp.bfloat16), w2_ref[...],
                 preferred_element_type=jnp.float32)
    h2 = jnp.maximum(h2 + b2_ref[...], 0.0)                       # (TB, 384) f32

    y = jnp.dot(h2.astype(jnp.bfloat16), w3_ref[...],
                preferred_element_type=jnp.float32)
    y = y + b3_ref[...]                                           # (TB, 128) f32

    out_ref[...] = (max_action * jnp.tanh(y)).astype(out_ref.dtype)


# ----------------------------------------------------------------------------
# Parameter handling
# ----------------------------------------------------------------------------
def init_actor_params(key, state_dim, action_dim):
    """Canonical f32 params mimicking torch.nn.Linear default init.

    Weights are stored (in_features, out_features) so the kernel computes
    y = x @ W + b (equivalent to torch's x @ W.T + b with W (out, in)).
    """
    def linear(k, fan_in, fan_out):
        kw, kb = jax.random.split(k)
        bound = 1.0 / jnp.sqrt(fan_in)
        w = jax.random.uniform(kw, (fan_in, fan_out), jnp.float32, -bound, bound)
        b = jax.random.uniform(kb, (1, fan_out), jnp.float32, -bound, bound)
        return w, b

    k1, k2, k3 = jax.random.split(key, 3)
    w1, b1 = linear(k1, state_dim, _H1)
    w2, b2 = linear(k2, _H1, _H2)
    w3, b3 = linear(k3, _H2, action_dim)
    return {"w1": w1, "b1": b1, "w2": w2, "b2": b2, "w3": w3, "b3": b3}


def prepare_actor_params(params):
    """One-time prep: zero-pad to lane-aligned shapes, cast weights to bf16.

    Do this once and reuse across calls so the padding / cast cost is amortized.
    """
    state_dim = params["w1"].shape[0]
    return {
        "w1": _pad2d(params["w1"], state_dim, _H1P).astype(jnp.bfloat16),
        "b1": _pad2d(params["b1"], 1, _H1P),                       # f32
        "w2": _pad2d(params["w2"], _H1P, _H2P).astype(jnp.bfloat16),
        "b2": _pad2d(params["b2"], 1, _H2P),                       # f32
        "w3": _pad2d(params["w3"], _H2P, _LANE).astype(jnp.bfloat16),
        "b3": _pad2d(params["b3"], 1, _LANE),                      # f32
    }


# ----------------------------------------------------------------------------
# Wrapper
# ----------------------------------------------------------------------------
@functools.partial(jax.jit, static_argnames=("max_action", "action_dim", "tile_b"))
def actor_forward(x, prepared, max_action, action_dim, *, tile_b=256):
    """x: (B, state_dim) f32.  prepared: output of prepare_actor_params.

    tile_b: batch tile (MXU M-tile). 256 suits v6e/v7x (2x256x256 MXU);
    use 128 on v5e (4x128x128 MXU). Small batches collapse to a single
    sublane-aligned tile so the grid has exactly one step.
    """
    batch, state_dim = x.shape

    # Pad batch so it divides evenly into row tiles (sublane-aligned to 8).
    tb = min(tile_b, _round_up(batch, 8))
    bp = _round_up(batch, tb)
    if bp != batch:
        x = jnp.pad(x, ((0, bp - batch), (0, 0)))

    grid = (bp // tb,)

    # max_action is a construction-time constant of the module -> static bake.
    kernel = functools.partial(_actor_kernel, max_action=float(max_action))

    # Weights/biases: full-extent blocks, constant index_map -> fetched once,
    # VMEM-resident across all batch tiles.
    def w_spec(shape):
        return pl.BlockSpec(shape, lambda i: (0, 0))

    flops = 2 * bp * (state_dim * _H1P + _H1P * _H2P + _H2P * _LANE)
    bytes_accessed = (
        x.size * 4 + bp * _LANE * 4
        + 2 * (state_dim * _H1P + _H1P * _H2P + _H2P * _LANE)   # bf16 weights
        + 4 * (_H1P + _H2P + _LANE))                             # f32 biases

    out_padded = pl.pallas_call(
        kernel,
        out_shape=jax.ShapeDtypeStruct((bp, _LANE), jnp.float32),
        grid=grid,
        in_specs=[
            pl.BlockSpec((tb, state_dim), lambda i: (i, 0)),   # x row tile
            w_spec((state_dim, _H1P)),                         # w1
            w_spec((1, _H1P)),                                 # b1
            w_spec((_H1P, _H2P)),                              # w2
            w_spec((1, _H2P)),                                 # b2
            w_spec((_H2P, _LANE)),                             # w3
            w_spec((1, _LANE)),                                # b3
        ],
        out_specs=pl.BlockSpec((tb, _LANE), lambda i: (i, 0)),
        compiler_params=pltpu.CompilerParams(
            dimension_semantics=("parallel",)),
        cost_estimate=pl.CostEstimate(
            flops=flops, transcendentals=bp * _LANE,
            bytes_accessed=bytes_accessed),
    )(x, prepared["w1"], prepared["b1"], prepared["w2"], prepared["b2"],
      prepared["w3"], prepared["b3"])

    return out_padded[:batch, :action_dim]


# ----------------------------------------------------------------------------
# Pure-JAX reference mirroring the kernel math (bf16 operands, f32 accumulate)
# ----------------------------------------------------------------------------
def actor_forward_ref(x, params, max_action):
    def dot_bf16(a, w):
        return jnp.dot(a.astype(jnp.bfloat16), w.astype(jnp.bfloat16),
                       preferred_element_type=jnp.float32)

    h1 = jnp.maximum(dot_bf16(x, params["w1"]) + params["b1"], 0.0)
    h2 = jnp.maximum(dot_bf16(h1, params["w2"]) + params["b2"], 0.0)
    return max_action * jnp.tanh(dot_bf16(h2, params["w3"]) + params["b3"])


if __name__ == "__main__":
    key = jax.random.PRNGKey(0)
    kx, kp = jax.random.split(key)

    batch, state_dim, action_dim = 2, 16, 4
    max_action = 2.0

    x = jax.random.normal(kx, (batch, state_dim), jnp.float32)
    params = init_actor_params(kp, state_dim, action_dim)
    prepared = prepare_actor_params(params)          # pad + bf16 cast, once

    out = actor_forward(x, prepared, max_action, action_dim)
    out = jax.block_until_ready(out)

    ref = actor_forward_ref(x, params, max_action)
    assert out.shape == (batch, action_dim), out.shape
    assert jnp.allclose(out, ref, atol=1e-3, rtol=1e-3), "mismatch vs reference"

    print("KERNEL_OK")
</pallas_src>

<mosaic_0001>
module attributes {stable_mosaic.version = 11 : i64} {
  func.func @_actor_kernel(%arg0: i32, %arg1: memref<8x16xf32, #tpu.memory_space<vmem>>, %arg2: memref<16x512xbf16, #tpu.memory_space<vmem>>, %arg3: memref<1x512xf32, #tpu.memory_space<vmem>>, %arg4: memref<512x384xbf16, #tpu.memory_space<vmem>>, %arg5: memref<1x384xf32, #tpu.memory_space<vmem>>, %arg6: memref<384x128xbf16, #tpu.memory_space<vmem>>, %arg7: memref<1x128xf32, #tpu.memory_space<vmem>>, %arg8: memref<8x128xf32, #tpu.memory_space<vmem>>) attributes {dimension_semantics = [#tpu.dimension_semantics<parallel>], iteration_bounds = array<i64: 1>, scalar_prefetch = 0 : i64, scratch_operands = 0 : i64, tpu.core_type = #tpu.core_type<tc>, window_params = [{transform_indices = @transform_0, window_bounds = array<i64: 8, 16>}, {pipeline_mode = #tpu.pipeline_mode<synchronous>, transform_indices = @transform_1, window_bounds = array<i64: 16, 512>}, {pipeline_mode = #tpu.pipeline_mode<synchronous>, transform_indices = @transform_2, window_bounds = array<i64: 1, 512>}, {pipeline_mode = #tpu.pipeline_mode<synchronous>, transform_indices = @transform_3, window_bounds = array<i64: 512, 384>}, {pipeline_mode = #tpu.pipeline_mode<synchronous>, transform_indices = @transform_4, window_bounds = array<i64: 1, 384>}, {pipeline_mode = #tpu.pipeline_mode<synchronous>, transform_indices = @transform_5, window_bounds = array<i64: 384, 128>}, {pipeline_mode = #tpu.pipeline_mode<synchronous>, transform_indices = @transform_6, window_bounds = array<i64: 1, 128>}, {transform_indices = @transform_7, window_bounds = array<i64: 8, 128>}]} {
    %c0 = arith.constant 0 : index
    %c0_0 = arith.constant 0 : index
    %0 = vector.load %arg1[%c0, %c0_0] : memref<8x16xf32, #tpu.memory_space<vmem>>, vector<8x16xf32>
    %1 = arith.truncf %0 : vector<8x16xf32> to vector<8x16xbf16>
    %c0_1 = arith.constant 0 : index
    %c0_2 = arith.constant 0 : index
    %2 = vector.load %arg2[%c0_1, %c0_2] : memref<16x512xbf16, #tpu.memory_space<vmem>>, vector<16x512xbf16>
    %cst = arith.constant dense<0.000000e+00> : vector<8x512xf32>
    %3 = tpu.matmul %1, %2, %cst {dimension_numbers = #tpu.dot_dimension_numbers<[1], [0], [0], [1], [0, 0, 1, 1], [], []>} : vector<8x16xbf16>, vector<16x512xbf16>, vector<8x512xf32> -> vector<8x512xf32>
    %c0_3 = arith.constant 0 : index
    %c0_4 = arith.constant 0 : index
    %4 = vector.load %arg3[%c0_3, %c0_4] : memref<1x512xf32, #tpu.memory_space<vmem>>, vector<1x512xf32>
    %5 = vector.broadcast %4 : vector<1x512xf32> to vector<8x512xf32>
    %6 = arith.addf %3, %5 : vector<8x512xf32>
    %cst_5 = arith.constant 0.000000e+00 : f32
    %7 = vector.broadcast %cst_5 : f32 to vector<8x512xf32>
    %8 = arith.maximumf %6, %7 : vector<8x512xf32>
    %9 = arith.truncf %8 : vector<8x512xf32> to vector<8x512xbf16>
    %c0_6 = arith.constant 0 : index
    %c0_7 = arith.constant 0 : index
    %10 = vector.load %arg4[%c0_6, %c0_7] : memref<512x384xbf16, #tpu.memory_space<vmem>>, vector<512x384xbf16>
    %cst_8 = arith.constant dense<0.000000e+00> : vector<8x384xf32>
    %11 = tpu.matmul %9, %10, %cst_8 {dimension_numbers = #tpu.dot_dimension_numbers<[1], [0], [0], [1], [0, 0, 1, 1], [], []>} : vector<8x512xbf16>, vector<512x384xbf16>, vector<8x384xf32> -> vector<8x384xf32>
    %c0_9 = arith.constant 0 : index
    %c0_10 = arith.constant 0 : index
    %12 = vector.load %arg5[%c0_9, %c0_10] : memref<1x384xf32, #tpu.memory_space<vmem>>, vector<1x384xf32>
    %13 = vector.broadcast %12 : vector<1x384xf32> to vector<8x384xf32>
    %14 = arith.addf %11, %13 : vector<8x384xf32>
    %cst_11 = arith.constant 0.000000e+00 : f32
    %15 = vector.broadcast %cst_11 : f32 to vector<8x384xf32>
    %16 = arith.maximumf %14, %15 : vector<8x384xf32>
    %17 = arith.truncf %16 : vector<8x384xf32> to vector<8x384xbf16>
    %c0_12 = arith.constant 0 : index
    %c0_13 = arith.constant 0 : index
    %18 = vector.load %arg6[%c0_12, %c0_13] : memref<384x128xbf16, #tpu.memory_space<vmem>>, vector<384x128xbf16>
    %cst_14 = arith.constant dense<0.000000e+00> : vector<8x128xf32>
    %19 = tpu.matmul %17, %18, %cst_14 {dimension_numbers = #tpu.dot_dimension_numbers<[1], [0], [0], [1], [0, 0, 1, 1], [], []>} : vector<8x384xbf16>, vector<384x128xbf16>, vector<8x128xf32> -> vector<8x128xf32>
    %c0_15 = arith.constant 0 : index
    %c0_16 = arith.constant 0 : index
    %20 = vector.load %arg7[%c0_15, %c0_16] : memref<1x128xf32, #tpu.memory_space<vmem>>, vector<1x128xf32>
    %21 = vector.broadcast %20 : vector<1x128xf32> to vector<8x128xf32>
    %22 = arith.addf %19, %21 : vector<8x128xf32>
    %23 = math.tanh %22 : vector<8x128xf32>
    %cst_17 = arith.constant 2.000000e+00 : f32
    %24 = vector.broadcast %cst_17 : f32 to vector<8x128xf32>
    %25 = arith.mulf %24, %23 : vector<8x128xf32>
    %c0_18 = arith.constant 0 : index
    %c0_19 = arith.constant 0 : index
    %26 = vector.load %arg8[%c0_18, %c0_19] : memref<8x128xf32, #tpu.memory_space<vmem>>, vector<8x128xf32>
    tpu.vector_store %arg8[%c0_18, %c0_19], %25 {strides = array<i32>} : memref<8x128xf32, #tpu.memory_space<vmem>>, vector<8x128xf32>,
    return
  }
  func.func @transform_0(%arg0: i32) -> (i32, i32) {
    %c0_i32 = arith.constant 0 : i32
    %c0_i32_0 = arith.constant 0 : i32
    return %arg0, %c0_i32 : i32, i32
  }
  func.func @transform_1(%arg0: i32) -> (i32, i32) {
    %c0_i32 = arith.constant 0 : i32
    %c0_i32_0 = arith.constant 0 : i32
    %c0_i32_1 = arith.constant 0 : i32
    return %c0_i32, %c0_i32_0 : i32, i32
  }
  func.func @transform_2(%arg0: i32) -> (i32, i32) {
    %c0_i32 = arith.constant 0 : i32
    %c0_i32_0 = arith.constant 0 : i32
    %c0_i32_1 = arith.constant 0 : i32
    return %c0_i32, %c0_i32_0 : i32, i32
  }
  func.func @transform_3(%arg0: i32) -> (i32, i32) {
    %c0_i32 = arith.constant 0 : i32
    %c0_i32_0 = arith.constant 0 : i32
    %c0_i32_1 = arith.constant 0 : i32
    return %c0_i32, %c0_i32_0 : i32, i32
  }
  func.func @transform_4(%arg0: i32) -> (i32, i32) {
    %c0_i32 = arith.constant 0 : i32
    %c0_i32_0 = arith.constant 0 : i32
    %c0_i32_1 = arith.constant 0 : i32
    return %c0_i32, %c0_i32_0 : i32, i32
  }
  func.func @transform_5(%arg0: i32) -> (i32, i32) {
    %c0_i32 = arith.constant 0 : i32
    %c0_i32_0 = arith.constant 0 : i32
    %c0_i32_1 = arith.constant 0 : i32
    return %c0_i32, %c0_i32_0 : i32, i32
  }
  func.func @transform_6(%arg0: i32) -> (i32, i32) {
    %c0_i32 = arith.constant 0 : i32
    %c0_i32_0 = arith.constant 0 : i32
    %c0_i32_1 = arith.constant 0 : i32
    return %c0_i32, %c0_i32_0 : i32, i32
  }
  func.func @transform_7(%arg0: i32) -> (i32, i32) {
    %c0_i32 = arith.constant 0 : i32
    %c0_i32_0 = arith.constant 0 : i32
    return %arg0, %c0_i32 : i32, i32
  }
}

</mosaic_0001>

<llo_original>
// kernel: actor_forward.1
$region0: #{actor_forward.1}
  #allocation0 [shape = 'u32[]', space=smem, size = 0x4, offset = 0x4, fixed_abs, tag = 'smem constant byte address 0x4 - core index']
  #allocation1 [shape = 'u32[144,128]{1,0:T(1,128)}', space=vmem, size = 0x12000, scoped, tag = 'internal scratch']
  %s0 = inlined_call_operand.vmem [shape: f32[8,16], index: 0, kind: input, shape index: {}]
  %s1 = inlined_call_operand.hbm [shape: bf16[16,512], index: 1, kind: input, shape index: {}]
  %s2 = inlined_call_operand.vmem [shape: f32[1,512], index: 2, kind: input, shape index: {}]
  %s3 = inlined_call_operand.hbm [shape: bf16[512,384], index: 3, kind: input, shape index: {}]
  %s4 = inlined_call_operand.vmem [shape: f32[1,384], index: 4, kind: input, shape index: {}]
  %s5 = inlined_call_operand.hbm [shape: bf16[384,128], index: 5, kind: input, shape index: {}]
  %s6 = inlined_call_operand.vmem [shape: f32[1,128], index: 6, kind: input, shape index: {}]
  %s7 = inlined_call_operand.vmem [shape: f32[8,128], index: 7, kind: output, shape index: {}]
  %s8 = sld [smem:[#allocation0]]
  $region50: #{actor_forward.1} parent=0
    _
  %s10 = ssub.s32 1, %s8
  %s11 = scalar_select 0, %s10, %s8
  $region1: #{actor_forward.1} parent=0
    #allocation2 [shape = 'u8[16384]{0}', space=vmem, size = 0x4000, scoped, tag = 'input window, operand 1, single buffered']
    #allocation3 [shape = 's32[1]{0}', space=sflag, size = 0x4, scoped, tag = 'scoped memory for actor_forward.1']
    #allocation4 [shape = 'u8[393216]{0}', space=vmem, size = 0x60000, scoped, tag = 'input window, operand 3, single buffered']
    #allocation5 [shape = 's32[1]{0}', space=sflag, size = 0x4, scoped, tag = 'scoped memory for actor_forward.1']
    #allocation6 [shape = 'u8[98304]{0}', space=vmem, size = 0x18000, scoped, tag = 'input window, operand 5, single buffered']
    %12 = vsyncpa [#allocation3], 0
    %13 = vsyncpa [#allocation5], 0
    // Predicated region
    $region2: #{actor_forward.1} parent=1 // pred_check
      _
    $region3: #{actor_forward.1} parent=1 // pred_check_branch
      %15 = sbr.rel (0) target = $region5
    $region4: #{actor_forward.1} parent=1 // pred_region
      _
    $region5: #{actor_forward.1} parent=1 // pred_fallthru
      _
    // Predicated region
    $region6: #{actor_forward.1} parent=1 // pred_check
      _
    $region7: #{actor_forward.1} parent=1 // pred_check_branch
      %17 = sbr.rel (0) target = $region9
    $region8: #{actor_forward.1} parent=1 // pred_region
      %s19 = ssub.s32 512, 512
      %20 = vsyncadd [#allocation3], %s19
      %s21 = sshll.u32 [#allocation2], 4
      %s22 = int_to_ptr.vmem [resolvable:$true] %s21
      %27 = dma.hbm_to_vmem [thread:$0]  %s1, 512, %s22, [#allocation3], 256, 256, 16
    $region9: #{actor_forward.1} parent=1 // pred_fallthru
      _
    // Predicated region
    $region10: #{actor_forward.1} parent=1 // pred_check
      _
    $region11: #{actor_forward.1} parent=1 // pred_check_branch
      %29 = sbr.rel (0) target = $region13
    $region12: #{actor_forward.1} parent=1 // pred_region
      _
    $region13: #{actor_forward.1} parent=1 // pred_fallthru
      _
    // Predicated region
    $region14: #{actor_forward.1} parent=1 // pred_check
      _
    $region15: #{actor_forward.1} parent=1 // pred_check_branch
      %31 = sbr.rel (0) target = $region17
    $region16: #{actor_forward.1} parent=1 // pred_region
      %s33 = ssub.s32 12288, 12288
      %34 = vsyncadd [#allocation5], %s33
      %s35 = sshll.u32 [#allocation4], 4
      %s36 = int_to_ptr.vmem [resolvable:$true] %s35
      %41 = dma.hbm_to_vmem [thread:$0]  %s3, 12288, %s36, [#allocation5], 192, 192, 12
    $region17: #{actor_forward.1} parent=1 // pred_fallthru
      _
    // Predicated region
    $region18: #{actor_forward.1} parent=1 // pred_check
      _
    $region19: #{actor_forward.1} parent=1 // pred_check_branch
      %43 = sbr.rel (0) target = $region21
    $region20: #{actor_forward.1} parent=1 // pred_region
      _
    $region21: #{actor_forward.1} parent=1 // pred_fallthru
      _
    // Predicated region
    $region22: #{actor_forward.1} parent=1 // pred_check
      _
    $region23: #{actor_forward.1} parent=1 // pred_check_branch
      %45 = sbr.rel (0) target = $region25
    $region24: #{actor_forward.1} parent=1 // pred_region
      %s47 = ssub.s32 3072, 3072
      %48 = vsyncadd [#allocation5], %s47
      %s49 = sshll.u32 [#allocation6], 4
      %s50 = int_to_ptr.vmem [resolvable:$true] %s49
      %55 = dma.hbm_to_vmem [thread:$0]  %s5, 3072, %s50, [#allocation5], 64, 64, 4
    $region25: #{actor_forward.1} parent=1 // pred_fallthru
      _
    // Predicated region
    $region26: #{actor_forward.1} parent=1 // pred_check
      _
    $region27: #{actor_forward.1} parent=1 // pred_check_branch
      %57 = sbr.rel (0) target = $region29
    $region28: #{actor_forward.1} parent=1 // pred_region
      _
    $region29: #{actor_forward.1} parent=1 // pred_fallthru
      _
    // Predicated region
    $region30: #{actor_forward.1} parent=1 // pred_check
      _
    $region31: #{actor_forward.1} parent=1 // pred_check_branch
      %59 = sbr.rel (0) target = $region33
    $region32: #{actor_forward.1} parent=1 // pred_region
      %60 = dma.done [#allocation3], 512
    $region33: #{actor_forward.1} parent=1 // pred_fallthru
      _
    // Predicated region
    $region34: #{actor_forward.1} parent=1 // pred_check
      _
    $region35: #{actor_forward.1} parent=1 // pred_check_branch
      %62 = sbr.rel (0) target = $region37
    $region36: #{actor_forward.1} parent=1 // pred_region
      %63 = dma.done [#allocation5], 12288
    $region37: #{actor_forward.1} parent=1 // pred_fallthru
      _
    // Predicated region
    $region38: #{actor_forward.1} parent=1 // pred_check
      _
    $region39: #{actor_forward.1} parent=1 // pred_check_branch
      %65 = sbr.rel (0) target = $region41
    $region40: #{actor_forward.1} parent=1 // pred_region
      %66 = dma.done [#allocation5], 3072
    $region41: #{actor_forward.1} parent=1 // pred_fallthru
      _
    %v68 = vld [vmem:[%s0] sm:$0xff]
    %v69 = vpack.c.bf16 %v68, %v68
    %v70 = vld [vmem:[#allocation2] sm:$0xff]
    %v71 = vld [vmem:[#allocation2 + $0x8] sm:$0xff]
    %v72 = vld [vmem:[#allocation2 + $0x10] sm:$0xff]
    %v73 = vld [vmem:[#allocation2 + $0x18] sm:$0xff]
    %v74 = vld [vmem:[%s2] sm:$0xf]
    %v76 = vlaneseq
    %v77 = vshrl.u32 %v76, 7
    %v78 = vsub.s32 0, %v77
    %v79 = vrot.slane %v74, %v78
    %v80 = vlaneseq
    %v81 = vshrl.u32 %v80, 7
    %v82 = vsub.s32 1, %v81
    %v83 = vrot.slane %v74, %v82
    %v84 = vlaneseq
    %v85 = vshrl.u32 %v84, 7
    %v86 = vsub.s32 2, %v85
    %v87 = vrot.slane %v74, %v86
    %v88 = vlaneseq
    %v89 = vshrl.u32 %v88, 7
    %v90 = vsub.s32 3, %v89
    %v91 = vrot.slane %v74, %v90
    %v100 = vunpack.c.l.b16 %v70
    %v101 = vunpack.c.h.b16 %v70
    %v102 = vunpack.c.l.b16 %v71
    %v103 = vunpack.c.h.b16 %v71
    %v104 = vunpack.c.l.b16 %v72
    %v105 = vunpack.c.h.b16 %v72
    %v106 = vunpack.c.l.b16 %v73
    %v107 = vunpack.c.h.b16 %v73
    %v108 = vpack.c.b16 %v104, %v100
    %v109 = vpack.c.b16 %v105, %v101
    %v110 = vpack.c.b16 %v106, %v102
    %v111 = vpack.c.b16 %v107, %v103
    %vm116 = vcmask 130048
    %v118 = vsel %vm116, %v69, 0
    %120 = vmatprep.subr.bf16.mxu0 %v109
    %121 = vmatpush1.bf16.msra.mxu0 %v108
    %122 = vmatprep.subr.bf16.mxu0 0
    %123 = vmatpush1.bf16.msra.mxu0 0
    %124 = vmatprep.subr.bf16.mxu0 0
    %125 = vmatpush1.bf16.msra.mxu0 0
    %126 = vmatprep.subr.bf16.mxu0 0
    %127 = vmatpush1.bf16.msra.mxu0 0
    %128 = vmatprep.subr.bf16.mxu0 0
    %129 = vmatpush1.bf16.msra.mxu0 0
    %130 = vmatprep.subr.bf16.mxu0 0
    %131 = vmatpush1.bf16.msra.mxu0 0
    %132 = vmatprep.subr.bf16.mxu0 0
    %133 = vmatpush1.bf16.msra.mxu0 0
    %134 = vmatprep.subr.bf16.mxu0 0
    %135 = vmatpush1.bf16.msra.mxu0 0
    %136 = vmatprep.subr.bf16.mxu0 0
    %137 = vmatpush1.bf16.msra.mxu0 0
    %138 = vmatprep.subr.bf16.mxu0 0
    %139 = vmatpush1.bf16.msra.mxu0 0
    %140 = vmatprep.subr.bf16.mxu0 0
    %141 = vmatpush1.bf16.msra.mxu0 0
    %142 = vmatprep.subr.bf16.mxu0 0
    %143 = vmatpush1.bf16.msra.mxu0 0
    %144 = vmatprep.subr.bf16.mxu0 0
    %145 = vmatpush1.bf16.msra.mxu0 0
    %146 = vmatprep.subr.bf16.mxu0 0
    %147 = vmatpush1.bf16.msra.mxu0 0
    %148 = vmatprep.subr.bf16.mxu0 0
    %149 = vmatpush1.bf16.msra.mxu0 0
    %150 = vmatprep.subr.bf16.mxu0 0
    %151 = vmatpush1.bf16.msra.mxu0 0
    %152 = vmatprep.mubr.bf16.mxu0 0
    %153 = vmatmul.mubr.bf16.gmra.mrb[0].mxu0 %v118
    %v154 = vpop.f32.mrb[0].mxu0
    %v155 = vadd.f32 %v79, %v154
    %v156 = vpop.f32.mrb[0].mxu0
    %v157 = vadd.f32 %v83, %v156
    %v158 = vpop.f32.mrb[0].mxu0
    %v159 = vpop.f32.mrb[0].mxu0
    %160 = vdwg.mxu0
    %161 = vmatprep.subr.bf16.mxu0 %v111
    %162 = vmatpush1.bf16.msra.mxu0 %v110
    %163 = vmatprep.subr.bf16.mxu0 0
    %164 = vmatpush1.bf16.msra.mxu0 0
    %165 = vmatprep.subr.bf16.mxu0 0
    %166 = vmatpush1.bf16.msra.mxu0 0
    %167 = vmatprep.subr.bf16.mxu0 0
    %168 = vmatpush1.bf16.msra.mxu0 0
    %169 = vmatprep.subr.bf16.mxu0 0
    %170 = vmatpush1.bf16.msra.mxu0 0
    %171 = vmatprep.subr.bf16.mxu0 0
    %172 = vmatpush1.bf16.msra.mxu0 0
    %173 = vmatprep.subr.bf16.mxu0 0
    %174 = vmatpush1.bf16.msra.mxu0 0
    %175 = vmatprep.subr.bf16.mxu0 0
    %176 = vmatpush1.bf16.msra.mxu0 0
    %177 = vmatprep.subr.bf16.mxu0 0
    %178 = vmatpush1.bf16.msra.mxu0 0
    %179 = vmatprep.subr.bf16.mxu0 0
    %180 = vmatpush1.bf16.msra.mxu0 0
    %181 = vmatprep.subr.bf16.mxu0 0
    %182 = vmatpush1.bf16.msra.mxu0 0
    %183 = vmatprep.subr.bf16.mxu0 0
    %184 = vmatpush1.bf16.msra.mxu0 0
    %185 = vmatprep.subr.bf16.mxu0 0
    %186 = vmatpush1.bf16.msra.mxu0 0
    %187 = vmatprep.subr.bf16.mxu0 0
    %188 = vmatpush1.bf16.msra.mxu0 0
    %189 = vmatprep.subr.bf16.mxu0 0
    %190 = vmatpush1.bf16.msra.mxu0 0
    %191 = vmatprep.subr.bf16.mxu0 0
    %192 = vmatpush1.bf16.msra.mxu0 0
    %193 = vmatprep.mubr.bf16.mxu0 0
    %194 = vmatmul.mubr.bf16.gmra.mrb[0].mxu0 %v118
    %v195 = vpop.f32.mrb[0].mxu0
    %v196 = vadd.f32 %v87, %v195
    %v197 = vpop.f32.mrb[0].mxu0
    %v198 = vadd.f32 %v91, %v197
    %v199 = vpop.f32.mrb[0].mxu0
    %v200 = vpop.f32.mrb[0].mxu0
    %201 = vdwg.mxu0
    %v202 = vmax.f32 %v155, 0.0
    %v203 = vmax.f32 %v157, 0.0
    %v204 = vmax.f32 %v196, 0.0
    %v205 = vmax.f32 %v198, 0.0
    %v206 = vpack.c.bf16 %v202, %v202
    %v207 = vpack.c.bf16 %v203, %v203
    %v208 = vpack.c.bf16 %v204, %v204
    %v209 = vpack.c.bf16 %v205, %v205
    %v210 = vld [vmem:[#allocation4] sm:$0xff]
    %v211 = vld [vmem:[#allocation4 + $0x8] sm:$0xf]
    %v212 = vld [vmem:[#allocation4 + $0xc] sm:$0xff]
    %v213 = vld [vmem:[#allocation4 + $0x14] sm:$0xf]
    %v214 = vld [vmem:[#allocation4 + $0x18] sm:$0xff]
    %v215 = vld [vmem:[#allocation4 + $0x20] sm:$0xf]
    %v216 = vld [vmem:[#allocation4 + $0x24] sm:$0xff]
    %v217 = vld [vmem:[#allocation4 + $0x2c] sm:$0xf]
    %v218 = vld [vmem:[#allocation4 + $0x30] sm:$0xff]
    %v219 = vld [vmem:[#allocation4 + $0x38] sm:$0xf]
    %v220 = vld [vmem:[#allocation4 + $0x3c] sm:$0xff]
    %v221 = vld [vmem:[#allocation4 + $0x44] sm:$0xf]
    %v222 = vld [vmem:[#allocation4 + $0x48] sm:$0xff]
    %v223 = vld [vmem:[#allocation4 + $0x50] sm:$0xf]
    %v224 = vld [vmem:[#allocation4 + $0x54] sm:$0xff]
    %v225 = vld [vmem:[#allocation4 + $0x5c] sm:$0xf]
    %v226 = vld [vmem:[#allocation4 + $0x60] sm:$0xff]
    %v227 = vld [vmem:[#allocation4 + $0x68] sm:$0xf]
    %v228 = vld [vmem:[#allocation4 + $0x6c] sm:$0xff]
    %v229 = vld [vmem:[#allocation4 + $0x74] sm:$0xf]
    %v230 = vld [vmem:[#allocation4 + $0x78] sm:$0xff]
    %v231 = vld [vmem:[#allocation4 + $0x80] sm:$0xf]
    %v232 = vld [vmem:[#allocation4 + $0x84] sm:$0xff]
    %v233 = vld [vmem:[#allocation4 + $0x8c] sm:$0xf]
    %v234 = vld [vmem:[#allocation4 + $0x90] sm:$0xff]
    %v235 = vld [vmem:[#allocation4 + $0x98] sm:$0xf]
    %v236 = vld [vmem:[#allocation4 + $0x9c] sm:$0xff]
    %v237 = vld [vmem:[#allocation4 + $0xa4] sm:$0xf]
    %v238 = vld [vmem:[#allocation4 + $0xa8] sm:$0xff]
    %v239 = vld [vmem:[#allocation4 + $0xb0] sm:$0xf]
    %v240 = vld [vmem:[#allocation4 + $0xb4] sm:$0xff]
    %v241 = vld [vmem:[#allocation4 + $0xbc] sm:$0xf]
    %v242 = vld [vmem:[#allocation4 + $0xc0] sm:$0xff]
    %v243 = vld [vmem:[#allocation4 + $0xc8] sm:$0xf]
    %v244 = vld [vmem:[#allocation4 + $0xcc] sm:$0xff]
    %v245 = vld [vmem:[#allocation4 + $0xd4] sm:$0xf]
    %v246 = vld [vmem:[#allocation4 + $0xd8] sm:$0xff]
    %v247 = vld [vmem:[#allocation4 + $0xe0] sm:$0xf]
    %v248 = vld [vmem:[#allocation4 + $0xe4] sm:$0xff]
    %v249 = vld [vmem:[#allocation4 + $0xec] sm:$0xf]
    %v250 = vld [vmem:[#allocation4 + $0xf0] sm:$0xff]
    %v251 = vld [vmem:[#allocation4 + $0xf8] sm:$0xf]
    %v252 = vld [vmem:[#allocation4 + $0xfc] sm:$0xff]
    %v253 = vld [vmem:[#allocation4 + $0x104] sm:$0xf]
    %v254 = vld [vmem:[#allocation4 + $0x108] sm:$0xff]
    %v255 = vld [vmem:[#allocation4 + $0x110] sm:$0xf]
    %v256 = vld [vmem:[#allocation4 + $0x114] sm:$0xff]
    %v257 = vld [vmem:[#allocation4 + $0x11c] sm:$0xf]
    %v258 = vld [vmem:[#allocation4 + $0x120] sm:$0xff]
    %v259 = vld [vmem:[#allocation4 + $0x128] sm:$0xf]
    %v260 = vld [vmem:[#allocation4 + $0x12c] sm:$0xff]
    %v261 = vld [vmem:[#allocation4 + $0x134] sm:$0xf]
    %v262 = vld [vmem:[#allocation4 + $0x138] sm:$0xff]
    %v263 = vld [vmem:[#allocation4 + $0x140] sm:$0xf]
    %v264 = vld [vmem:[#allocation4 + $0x144] sm:$0xff]
    %v265 = vld [vmem:[#allocation4 + $0x14c] sm:$0xf]
    %v266 = vld [vmem:[#allocation4 + $0x150] sm:$0xff]
    %v267 = vld [vmem:[#allocation4 + $0x158] sm:$0xf]
    %v268 = vld [vmem:[#allocation4 + $0x15c] sm:$0xff]
    %v269 = vld [vmem:[#allocation4 + $0x164] sm:$0xf]
    %v270 = vld [vmem:[#allocation4 + $0x168] sm:$0xff]
    %v271 = vld [vmem:[#allocation4 + $0x170] sm:$0xf]
    %v272 = vld [vmem:[#allocation4 + $0x174] sm:$0xff]
    %v273 = vld [vmem:[#allocation4 + $0x17c] sm:$0xf]
    %v274 = vld [vmem:[#allocation4 + $0x180] sm:$0xff]
    %v275 = vld [vmem:[#allocation4 + $0x188] sm:$0xf]
    %v276 = vld [vmem:[#allocation4 + $0x18c] sm:$0xff]
    %v277 = vld [vmem:[#allocation4 + $0x194] sm:$0xf]
    %v278 = vld [vmem:[#allocation4 + $0x198] sm:$0xff]
    %v279 = vld [vmem:[#allocation4 + $0x1a0] sm:$0xf]
    %v280 = vld [vmem:[#allocation4 + $0x1a4] sm:$0xff]
    %v281 = vld [vmem:[#allocation4 + $0x1ac] sm:$0xf]
    %v282 = vld [vmem:[#allocation4 + $0x1b0] sm:$0xff]
    %v283 = vld [vmem:[#allocation4 + $0x1b8] sm:$0xf]
    %v284 = vld [vmem:[#allocation4 + $0x1bc] sm:$0xff]
    %v285 = vld [vmem:[#allocation4 + $0x1c4] sm:$0xf]
    %v286 = vld [vmem:[#allocation4 + $0x1c8] sm:$0xff]
    %v287 = vld [vmem:[#allocation4 + $0x1d0] sm:$0xf]
    %v288 = vld [vmem:[#allocation4 + $0x1d4] sm:$0xff]
    %v289 = vld [vmem:[#allocation4 + $0x1dc] sm:$0xf]
    %v290 = vld [vmem:[#allocation4 + $0x1e0] sm:$0xff]
    %v291 = vld [vmem:[#allocation4 + $0x1e8] sm:$0xf]
    %v292 = vld [vmem:[#allocation4 + $0x1ec] sm:$0xff]
    %v293 = vld [vmem:[#allocation4 + $0x1f4] sm:$0xf]
    %v294 = vld [vmem:[#allocation4 + $0x1f8] sm:$0xff]
    %v295 = vld [vmem:[#allocation4 + $0x200] sm:$0xf]
    %v296 = vld [vmem:[#allocation4 + $0x204] sm:$0xff]
    %v297 = vld [vmem:[#allocation4 + $0x20c] sm:$0xf]
    %v298 = vld [vmem:[#allocation4 + $0x210] sm:$0xff]
    %v299 = vld [vmem:[#allocation4 + $0x218] sm:$0xf]
    %v300 = vld [vmem:[#allocation4 + $0x21c] sm:$0xff]
    %v301 = vld [vmem:[#allocation4 + $0x224] sm:$0xf]
    %v302 = vld [vmem:[#allocation4 + $0x228] sm:$0xff]
    %v303 = vld [vmem:[#allocation4 + $0x230] sm:$0xf]
    %v304 = vld [vmem:[#allocation4 + $0x234] sm:$0xff]
    %v305 = vld [vmem:[#allocation4 + $0x23c] sm:$0xf]
    %v306 = vld [vmem:[#allocation4 + $0x240] sm:$0xff]
    %v307 = vld [vmem:[#allocation4 + $0x248] sm:$0xf]
    %v308 = vld [vmem:[#allocation4 + $0x24c] sm:$0xff]
    %v309 = vld [vmem:[#allocation4 + $0x254] sm:$0xf]
    %v310 = vld [vmem:[#allocation4 + $0x258] sm:$0xff]
    %v311 = vld [vmem:[#allocation4 + $0x260] sm:$0xf]
    %v312 = vld [vmem:[#allocation4 + $0x264] sm:$0xff]
    %v313 = vld [vmem:[#allocation4 + $0x26c] sm:$0xf]
    %v314 = vld [vmem:[#allocation4 + $0x270] sm:$0xff]
    %v315 = vld [vmem:[#allocation4 + $0x278] sm:$0xf]
    %v316 = vld [vmem:[#allocation4 + $0x27c] sm:$0xff]
    %v317 = vld [vmem:[#allocation4 + $0x284] sm:$0xf]
    %v318 = vld [vmem:[#allocation4 + $0x288] sm:$0xff]
    %v319 = vld [vmem:[#allocation4 + $0x290] sm:$0xf]
    %v320 = vld [vmem:[#allocation4 + $0x294] sm:$0xff]
    %v321 = vld [vmem:[#allocation4 + $0x29c] sm:$0xf]
    %v322 = vld [vmem:[#allocation4 + $0x2a0] sm:$0xff]
    %v323 = vld [vmem:[#allocation4 + $0x2a8] sm:$0xf]
    %v324 = vld [vmem:[#allocation4 + $0x2ac] sm:$0xff]
    %v325 = vld [vmem:[#allocation4 + $0x2b4] sm:$0xf]
    %v326 = vld [vmem:[#allocation4 + $0x2b8] sm:$0xff]
    %v327 = vld [vmem:[#allocation4 + $0x2c0] sm:$0xf]
    %v328 = vld [vmem:[#allocation4 + $0x2c4] sm:$0xff]
    %v329 = vld [vmem:[#allocation4 + $0x2cc] sm:$0xf]
    %v330 = vld [vmem:[#allocation4 + $0x2d0] sm:$0xff]
    %v331 = vld [vmem:[#allocation4 + $0x2d8] sm:$0xf]
    %v332 = vld [vmem:[#allocation4 + $0x2dc] sm:$0xff]
    %v333 = vld [vmem:[#allocation4 + $0x2e4] sm:$0xf]
    %v334 = vld [vmem:[#allocation4 + $0x2e8] sm:$0xff]
    %v335 = vld [vmem:[#allocation4 + $0x2f0] sm:$0xf]
    %v336 = vld [vmem:[#allocation4 + $0x2f4] sm:$0xff]
    %v337 = vld [vmem:[#allocation4 + $0x2fc] sm:$0xf]
    %v338 = vld [vmem:[%s4] sm:$0x7]
    %v340 = vlaneseq
    %v341 = vshrl.u32 %v340, 7
    %v342 = vsub.s32 0, %v341
    %v343 = vrot.slane %v338, %v342
    %v344 = vlaneseq
    %v345 = vshrl.u32 %v344, 7
    %v346 = vsub.s32 1, %v345
    %v347 = vrot.slane %v338, %v346
    %v348 = vlaneseq
    %v349 = vshrl.u32 %v348, 7
    %v350 = vsub.s32 2, %v349
    %v351 = vrot.slane %v338, %v350
    %v483 = vunpack.c.l.b16 %v210
    %v484 = vunpack.c.h.b16 %v210
    %v485 = vunpack.c.l.b16 %v211
    %v486 = vunpack.c.l.b16 %v212
    %v487 = vunpack.c.h.b16 %v212
    %v488 = vunpack.c.l.b16 %v213
    %v489 = vunpack.c.l.b16 %v214
    %v490 = vunpack.c.h.b16 %v214
    %v491 = vunpack.c.l.b16 %v215
    %v492 = vunpack.c.l.b16 %v216
    %v493 = vunpack.c.h.b16 %v216
    %v494 = vunpack.c.l.b16 %v217
    %v495 = vunpack.c.l.b16 %v218
    %v496 = vunpack.c.h.b16 %v218
    %v497 = vunpack.c.l.b16 %v219
    %v498 = vunpack.c.l.b16 %v220
    %v499 = vunpack.c.h.b16 %v220
    %v500 = vunpack.c.l.b16 %v221
    %v501 = vunpack.c.l.b16 %v222
    %v502 = vunpack.c.h.b16 %v222
    %v503 = vunpack.c.l.b16 %v223
    %v504 = vunpack.c.l.b16 %v224
    %v505 = vunpack.c.h.b16 %v224
    %v506 = vunpack.c.l.b16 %v225
    %v507 = vunpack.c.l.b16 %v226
    %v508 = vunpack.c.h.b16 %v226
    %v509 = vunpack.c.l.b16 %v227
    %v510 = vunpack.c.l.b16 %v228
    %v511 = vunpack.c.h.b16 %v228
    %v512 = vunpack.c.l.b16 %v229
    %v513 = vunpack.c.l.b16 %v230
    %v514 = vunpack.c.h.b16 %v230
    %v515 = vunpack.c.l.b16 %v231
    %v516 = vunpack.c.l.b16 %v232
    %v517 = vunpack.c.h.b16 %v232
    %v518 = vunpack.c.l.b16 %v233
    %v519 = vunpack.c.l.b16 %v234
    %v520 = vunpack.c.h.b16 %v234
    %v521 = vunpack.c.l.b16 %v235
    %v522 = vunpack.c.l.b16 %v236
    %v523 = vunpack.c.h.b16 %v236
    %v524 = vunpack.c.l.b16 %v237
    %v525 = vunpack.c.l.b16 %v238
    %v526 = vunpack.c.h.b16 %v238
    %v527 = vunpack.c.l.b16 %v239
    %v528 = vunpack.c.l.b16 %v240
    %v529 = vunpack.c.h.b16 %v240
    %v530 = vunpack.c.l.b16 %v241
    %v531 = vunpack.c.l.b16 %v242
    %v532 = vunpack.c.h.b16 %v242
    %v533 = vunpack.c.l.b16 %v243
    %v534 = vunpack.c.l.b16 %v244
    %v535 = vunpack.c.h.b16 %v244
    %v536 = vunpack.c.l.b16 %v245
    %v537 = vunpack.c.l.b16 %v246
    %v538 = vunpack.c.h.b16 %v246
    %v539 = vunpack.c.l.b16 %v247
    %v540 = vunpack.c.l.b16 %v248
    %v541 = vunpack.c.h.b16 %v248
    %v542 = vunpack.c.l.b16 %v249
    %v543 = vunpack.c.l.b16 %v250
    %v544 = vunpack.c.h.b16 %v250
    %v545 = vunpack.c.l.b16 %v251
    %v546 = vunpack.c.l.b16 %v252
    %v547 = vunpack.c.h.b16 %v252
    %v548 = vunpack.c.l.b16 %v253
    %v549 = vunpack.c.l.b16 %v254
    %v550 = vunpack.c.h.b16 %v254
    %v551 = vunpack.c.l.b16 %v255
    %v552 = vunpack.c.l.b16 %v256
    %v553 = vunpack.c.h.b16 %v256
    %v554 = vunpack.c.l.b16 %v257
    %v555 = vunpack.c.l.b16 %v258
    %v556 = vunpack.c.h.b16 %v258
    %v557 = vunpack.c.l.b16 %v259
    %v558 = vunpack.c.l.b16 %v260
    %v559 = vunpack.c.h.b16 %v260
    %v560 = vunpack.c.l.b16 %v261
    %v561 = vunpack.c.l.b16 %v262
    %v562 = vunpack.c.h.b16 %v262
    %v563 = vunpack.c.l.b16 %v263
    %v564 = vunpack.c.l.b16 %v264
    %v565 = vunpack.c.h.b16 %v264
    %v566 = vunpack.c.l.b16 %v265
    %v567 = vunpack.c.l.b16 %v266
    %v568 = vunpack.c.h.b16 %v266
    %v569 = vunpack.c.l.b16 %v267
    %v570 = vunpack.c.l.b16 %v268
    %v571 = vunpack.c.h.b16 %v268
    %v572 = vunpack.c.l.b16 %v269
    %v573 = vunpack.c.l.b16 %v270
    %v574 = vunpack.c.h.b16 %v270
    %v575 = vunpack.c.l.b16 %v271
    %v576 = vunpack.c.l.b16 %v272
    %v577 = vunpack.c.h.b16 %v272
    %v578 = vunpack.c.l.b16 %v273
    %v579 = vunpack.c.l.b16 %v274
    %v580 = vunpack.c.h.b16 %v274
    %v581 = vunpack.c.l.b16 %v275
    %v582 = vunpack.c.l.b16 %v276
    %v583 = vunpack.c.h.b16 %v276
    %v584 = vunpack.c.l.b16 %v277
    %v585 = vunpack.c.l.b16 %v278
    %v586 = vunpack.c.h.b16 %v278
    %v587 = vunpack.c.l.b16 %v279
    %v588 = vunpack.c.l.b16 %v280
    %v589 = vunpack.c.h.b16 %v280
    %v590 = vunpack.c.l.b16 %v281
    %v591 = vunpack.c.l.b16 %v282
    %v592 = vunpack.c.h.b16 %v282
    %v593 = vunpack.c.l.b16 %v283
    %v594 = vunpack.c.l.b16 %v284
    %v595 = vunpack.c.h.b16 %v284
    %v596 = vunpack.c.l.b16 %v285
    %v597 = vunpack.c.l.b16 %v286
    %v598 = vunpack.c.h.b16 %v286
    %v599 = vunpack.c.l.b16 %v287
    %v600 = vunpack.c.l.b16 %v288
    %v601 = vunpack.c.h.b16 %v288
    %v602 = vunpack.c.l.b16 %v289
    %v603 = vunpack.c.l.b16 %v290
    %v604 = vunpack.c.h.b16 %v290
    %v605 = vunpack.c.l.b16 %v291
    %v606 = vunpack.c.l.b16 %v292
    %v607 = vunpack.c.h.b16 %v292
    %v608 = vunpack.c.l.b16 %v293
    %v609 = vunpack.c.l.b16 %v294
    %v610 = vunpack.c.h.b16 %v294
    %v611 = vunpack.c.l.b16 %v295
    %v612 = vunpack.c.l.b16 %v296
    %v613 = vunpack.c.h.b16 %v296
    %v614 = vunpack.c.l.b16 %v297
    %v615 = vunpack.c.l.b16 %v298
    %v616 = vunpack.c.h.b16 %v298
    %v617 = vunpack.c.l.b16 %v299
    %v618 = vunpack.c.l.b16 %v300
    %v619 = vunpack.c.h.b16 %v300
    %v620 = vunpack.c.l.b16 %v301
    %v621 = vunpack.c.l.b16 %v302
    %v622 = vunpack.c.h.b16 %v302
    %v623 = vunpack.c.l.b16 %v303
    %v624 = vunpack.c.l.b16 %v304
    %v625 = vunpack.c.h.b16 %v304
    %v626 = vunpack.c.l.b16 %v305
    %v627 = vunpack.c.l.b16 %v306
    %v628 = vunpack.c.h.b16 %v306
    %v629 = vunpack.c.l.b16 %v307
    %v630 = vunpack.c.l.b16 %v308
    %v631 = vunpack.c.h.b16 %v308
    %v632 = vunpack.c.l.b16 %v309
    %v633 = vunpack.c.l.b16 %v310
    %v634 = vunpack.c.h.b16 %v310
    %v635 = vunpack.c.l.b16 %v311
    %v636 = vunpack.c.l.b16 %v312
    %v637 = vunpack.c.h.b16 %v312
    %v638 = vunpack.c.l.b16 %v313
    %v639 = vunpack.c.l.b16 %v314
    %v640 = vunpack.c.h.b16 %v314
    %v641 = vunpack.c.l.b16 %v315
    %v642 = vunpack.c.l.b16 %v316
    %v643 = vunpack.c.h.b16 %v316
    %v644 = vunpack.c.l.b16 %v317
    %v645 = vunpack.c.l.b16 %v318
    %v646 = vunpack.c.h.b16 %v318
    %v647 = vunpack.c.l.b16 %v319
    %v648 = vunpack.c.l.b16 %v320
    %v649 = vunpack.c.h.b16 %v320
    %v650 = vunpack.c.l.b16 %v321
    %v651 = vunpack.c.l.b16 %v322
    %v652 = vunpack.c.h.b16 %v322
    %v653 = vunpack.c.l.b16 %v323
    %v654 = vunpack.c.l.b16 %v324
    %v655 = vunpack.c.h.b16 %v324
    %v656 = vunpack.c.l.b16 %v325
    %v657 = vunpack.c.l.b16 %v326
    %v658 = vunpack.c.h.b16 %v326
    %v659 = vunpack.c.l.b16 %v327
    %v660 = vunpack.c.l.b16 %v328
    %v661 = vunpack.c.h.b16 %v328
    %v662 = vunpack.c.l.b16 %v329
    %v663 = vunpack.c.l.b16 %v330
    %v664 = vunpack.c.h.b16 %v330
    %v665 = vunpack.c.l.b16 %v331
    %v666 = vunpack.c.l.b16 %v332
    %v667 = vunpack.c.h.b16 %v332
    %v668 = vunpack.c.l.b16 %v333
    %v669 = vunpack.c.l.b16 %v334
    %v670 = vunpack.c.h.b16 %v334
    %v671 = vunpack.c.l.b16 %v335
    %v672 = vunpack.c.l.b16 %v336
    %v673 = vunpack.c.h.b16 %v336
    %v674 = vunpack.c.l.b16 %v337
    %v675 = vpack.c.b16 %v486, %v483
    %v676 = vpack.c.b16 %v487, %v484
    %v677 = vpack.c.b16 %v488, %v485
    %v678 = vpack.c.b16 %v492, %v489
    %v679 = vpack.c.b16 %v493, %v490
    %v680 = vpack.c.b16 %v494, %v491
    %v681 = vpack.c.b16 %v498, %v495
    %v682 = vpack.c.b16 %v499, %v496
    %v683 = vpack.c.b16 %v500, %v497
    %v684 = vpack.c.b16 %v504, %v501
    %v685 = vpack.c.b16 %v505, %v502
    %v686 = vpack.c.b16 %v506, %v503
    %v687 = vpack.c.b16 %v510, %v507
    %v688 = vpack.c.b16 %v511, %v508
    %v689 = vpack.c.b16 %v512, %v509
    %v690 = vpack.c.b16 %v516, %v513
    %v691 = vpack.c.b16 %v517, %v514
    %v692 = vpack.c.b16 %v518, %v515
    %v693 = vpack.c.b16 %v522, %v519
    %v694 = vpack.c.b16 %v523, %v520
    %v695 = vpack.c.b16 %v524, %v521
    %v696 = vpack.c.b16 %v528, %v525
    %v697 = vpack.c.b16 %v529, %v526
    %v698 = vpack.c.b16 %v530, %v527
    %v699 = vpack.c.b16 %v534, %v531
    %v700 = vpack.c.b16 %v535, %v532
    %v701 = vpack.c.b16 %v536, %v533
    %v702 = vpack.c.b16 %v540, %v537
    %v703 = vpack.c.b16 %v541, %v538
    %v704 = vpack.c.b16 %v542, %v539
    %v705 = vpack.c.b16 %v546, %v543
    %v706 = vpack.c.b16 %v547, %v544
    %v707 = vpack.c.b16 %v548, %v545
    %v708 = vpack.c.b16 %v552, %v549
    %v709 = vpack.c.b16 %v553, %v550
    %v710 = vpack.c.b16 %v554, %v551
    %v711 = vpack.c.b16 %v558, %v555
    %v712 = vpack.c.b16 %v559, %v556
    %v713 = vpack.c.b16 %v560, %v557
    %v714 = vpack.c.b16 %v564, %v561
    %v715 = vpack.c.b16 %v565, %v562
    %v716 = vpack.c.b16 %v566, %v563
    %v717 = vpack.c.b16 %v570, %v567
    %v718 = vpack.c.b16 %v571, %v568
    %v719 = vpack.c.b16 %v572, %v569
    %v720 = vpack.c.b16 %v576, %v573
    %v721 = vpack.c.b16 %v577, %v574
    %v722 = vpack.c.b16 %v578, %v575
    %v723 = vpack.c.b16 %v582, %v579
    %v724 = vpack.c.b16 %v583, %v580
    %v725 = vpack.c.b16 %v584, %v581
    %v726 = vpack.c.b16 %v588, %v585
    %v727 = vpack.c.b16 %v589, %v586
    %v728 = vpack.c.b16 %v590, %v587
    %v729 = vpack.c.b16 %v594, %v591
    %v730 = vpack.c.b16 %v595, %v592
    %v731 = vpack.c.b16 %v596, %v593
    %v732 = vpack.c.b16 %v600, %v597
    %v733 = vpack.c.b16 %v601, %v598
    %v734 = vpack.c.b16 %v602, %v599
    %v735 = vpack.c.b16 %v606, %v603
    %v736 = vpack.c.b16 %v607, %v604
    %v737 = vpack.c.b16 %v608, %v605
    %v738 = vpack.c.b16 %v612, %v609
    %v739 = vpack.c.b16 %v613, %v610
    %v740 = vpack.c.b16 %v614, %v611
    %v741 = vpack.c.b16 %v618, %v615
    %v742 = vpack.c.b16 %v619, %v616
    %v743 = vpack.c.b16 %v620, %v617
    %v744 = vpack.c.b16 %v624, %v621
    %v745 = vpack.c.b16 %v625, %v622
    %v746 = vpack.c.b16 %v626, %v623
    %v747 = vpack.c.b16 %v630, %v627
    %v748 = vpack.c.b16 %v631, %v628
    %v749 = vpack.c.b16 %v632, %v629
    %v750 = vpack.c.b16 %v636, %v633
    %v751 = vpack.c.b16 %v637, %v634
    %v752 = vpack.c.b16 %v638, %v635
    %v753 = vpack.c.b16 %v642, %v639
    %v754 = vpack.c.b16 %v643, %v640
    %v755 = vpack.c.b16 %v644, %v641
    %v756 = vpack.c.b16 %v648, %v645
    %v757 = vpack.c.b16 %v649, %v646
    %v758 = vpack.c.b16 %v650, %v647
    %v759 = vpack.c.b16 %v654, %v651
    %v760 = vpack.c.b16 %v655, %v652
    %v761 = vpack.c.b16 %v656, %v653
    %v762 = vpack.c.b16 %v660, %v657
    %v763 = vpack.c.b16 %v661, %v658
    %v764 = vpack.c.b16 %v662, %v659
    %v765 = vpack.c.b16 %v666, %v663
    %v766 = vpack.c.b16 %v667, %v664
    %v767 = vpack.c.b16 %v668, %v665
    %v768 = vpack.c.b16 %v672, %v669
    %v769 = vpack.c.b16 %v673, %v670
    %v770 = vpack.c.b16 %v674, %v671
    %867 = vmatprep.subr.bf16.mxu0 %v676
    %868 = vmatpush1.bf16.msra.mxu0 %v675
    %869 = vmatprep.subr.bf16.mxu0 %v679
    %870 = vmatpush1.bf16.msra.mxu0 %v678
    %871 = vmatprep.subr.bf16.mxu0 %v682
    %872 = vmatpush1.bf16.msra.mxu0 %v681
    %873 = vmatprep.subr.bf16.mxu0 %v685
    %874 = vmatpush1.bf16.msra.mxu0 %v684
    %875 = vmatprep.subr.bf16.mxu0 %v688
    %876 = vmatpush1.bf16.msra.mxu0 %v687
    %877 = vmatprep.subr.bf16.mxu0 %v691
    %878 = vmatpush1.bf16.msra.mxu0 %v690
    %879 = vmatprep.subr.bf16.mxu0 %v694
    %880 = vmatpush1.bf16.msra.mxu0 %v693
    %881 = vmatprep.subr.bf16.mxu0 %v697
    %882 = vmatpush1.bf16.msra.mxu0 %v696
    %883 = vmatprep.subr.bf16.mxu0 %v700
    %884 = vmatpush1.bf16.msra.mxu0 %v699
    %885 = vmatprep.subr.bf16.mxu0 %v703
    %886 = vmatpush1.bf16.msra.mxu0 %v702
    %887 = vmatprep.subr.bf16.mxu0 %v706
    %888 = vmatpush1.bf16.msra.mxu0 %v705
    %889 = vmatprep.subr.bf16.mxu0 %v709
    %890 = vmatpush1.bf16.msra.mxu0 %v708
    %891 = vmatprep.subr.bf16.mxu0 %v712
    %892 = vmatpush1.bf16.msra.mxu0 %v711
    %893 = vmatprep.subr.bf16.mxu0 %v715
    %894 = vmatpush1.bf16.msra.mxu0 %v714
    %895 = vmatprep.subr.bf16.mxu0 %v718
    %896 = vmatpush1.bf16.msra.mxu0 %v717
    %897 = vmatprep.subr.bf16.mxu0 %v721
    %898 = vmatpush1.bf16.msra.mxu0 %v720
    %899 = vmatprep.mubr.bf16.mxu0 %v207
    %900 = vmatmul.mubr.bf16.gmra.mrb[0].mxu0 %v206
    %v901 = vpop.f32.mrb[0].mxu0
    %v902 = vadd.f32 %v343, %v901
    %v903 = vpop.f32.mrb[0].mxu0
    %v904 = vadd.f32 %v347, %v903
    %v905 = vpop.f32.mrb[0].mxu0
    %v906 = vpop.f32.mrb[0].mxu0
    %907 = vdwg.mxu0
    %908 = vmatprep.subr.bf16.mxu0 %v724
    %909 = vmatpush1.bf16.msra.mxu0 %v723
    %910 = vmatprep.subr.bf16.mxu0 %v727
    %911 = vmatpush1.bf16.msra.mxu0 %v726
    %912 = vmatprep.subr.bf16.mxu0 %v730
    %913 = vmatpush1.bf16.msra.mxu0 %v729
    %914 = vmatprep.subr.bf16.mxu0 %v733
    %915 = vmatpush1.bf16.msra.mxu0 %v732
    %916 = vmatprep.subr.bf16.mxu0 %v736
    %917 = vmatpush1.bf16.msra.mxu0 %v735
    %918 = vmatprep.subr.bf16.mxu0 %v739
    %919 = vmatpush1.bf16.msra.mxu0 %v738
    %920 = vmatprep.subr.bf16.mxu0 %v742
    %921 = vmatpush1.bf16.msra.mxu0 %v741
    %922 = vmatprep.subr.bf16.mxu0 %v745
    %923 = vmatpush1.bf16.msra.mxu0 %v744
    %924 = vmatprep.subr.bf16.mxu0 %v748
    %925 = vmatpush1.bf16.msra.mxu0 %v747
    %926 = vmatprep.subr.bf16.mxu0 %v751
    %927 = vmatpush1.bf16.msra.mxu0 %v750
    %928 = vmatprep.subr.bf16.mxu0 %v754
    %929 = vmatpush1.bf16.msra.mxu0 %v753
    %930 = vmatprep.subr.bf16.mxu0 %v757
    %931 = vmatpush1.bf16.msra.mxu0 %v756
    %932 = vmatprep.subr.bf16.mxu0 %v760
    %933 = vmatpush1.bf16.msra.mxu0 %v759
    %934 = vmatprep.subr.bf16.mxu0 %v763
    %935 = vmatpush1.bf16.msra.mxu0 %v762
    %936 = vmatprep.subr.bf16.mxu0 %v766
    %937 = vmatpush1.bf16.msra.mxu0 %v765
    %938 = vmatprep.subr.bf16.mxu0 %v769
    %939 = vmatpush1.bf16.msra.mxu0 %v768
    %940 = vmatprep.mubr.bf16.mxu0 %v209
    %941 = vmatmul.mubr.bf16.gmra.mrb[0].mxu0 %v208
    %v942 = vpop.f32.mrb[0].mxu0
    %v943 = vadd.f32 %v902, %v942
    %v944 = vpop.f32.mrb[0].mxu0
    %v945 = vadd.f32 %v904, %v944
    %v946 = vpop.f32.mrb[0].mxu0
    %v947 = vpop.f32.mrb[0].mxu0
    %948 = vdwg.mxu0
    %949 = vmatprep.subr.bf16.mxu0 0
    %950 = vmatpush1.bf16.msra.mxu0 %v677
    %951 = vmatprep.subr.bf16.mxu0 0
    %952 = vmatpush1.bf16.msra.mxu0 %v680
    %953 = vmatprep.subr.bf16.mxu0 0
    %954 = vmatpush1.bf16.msra.mxu0 %v683
    %955 = vmatprep.subr.bf16.mxu0 0
    %956 = vmatpush1.bf16.msra.mxu0 %v686
    %957 = vmatprep.subr.bf16.mxu0 0
    %958 = vmatpush1.bf16.msra.mxu0 %v689
    %959 = vmatprep.subr.bf16.mxu0 0
    %960 = vmatpush1.bf16.msra.mxu0 %v692
    %961 = vmatprep.subr.bf16.mxu0 0
    %962 = vmatpush1.bf16.msra.mxu0 %v695
    %963 = vmatprep.subr.bf16.mxu0 0
    %964 = vmatpush1.bf16.msra.mxu0 %v698
    %965 = vmatprep.subr.bf16.mxu0 0
    %966 = vmatpush1.bf16.msra.mxu0 %v701
    %967 = vmatprep.subr.bf16.mxu0 0
    %968 = vmatpush1.bf16.msra.mxu0 %v704
    %969 = vmatprep.subr.bf16.mxu0 0
    %970 = vmatpush1.bf16.msra.mxu0 %v707
    %971 = vmatprep.subr.bf16.mxu0 0
    %972 = vmatpush1.bf16.msra.mxu0 %v710
    %973 = vmatprep.subr.bf16.mxu0 0
    %974 = vmatpush1.bf16.msra.mxu0 %v713
    %975 = vmatprep.subr.bf16.mxu0 0
    %976 = vmatpush1.bf16.msra.mxu0 %v716
    %977 = vmatprep.subr.bf16.mxu0 0
    %978 = vmatpush1.bf16.msra.mxu0 %v719
    %979 = vmatprep.subr.bf16.mxu0 0
    %980 = vmatpush1.bf16.msra.mxu0 %v722
    %981 = vmatprep.mubr.bf16.mxu0 %v207
    %982 = vmatmul.mubr.bf16.gmra.mrb[0].mxu0 %v206
    %v983 = vpop.f32.mrb[0].mxu0
    %v984 = vadd.f32 %v351, %v983
    %v985 = vpop.f32.mrb[0].mxu0
    %v986 = vpop.f32.mrb[0].mxu0
    %v987 = vpop.f32.mrb[0].mxu0
    %988 = vdwg.mxu0
    %989 = vmatprep.subr.bf16.mxu0 0
    %990 = vmatpush1.bf16.msra.mxu0 %v725
    %991 = vmatprep.subr.bf16.mxu0 0
    %992 = vmatpush1.bf16.msra.mxu0 %v728
    %993 = vmatprep.subr.bf16.mxu0 0
    %994 = vmatpush1.bf16.msra.mxu0 %v731
    %995 = vmatprep.subr.bf16.mxu0 0
    %996 = vmatpush1.bf16.msra.mxu0 %v734
    %997 = vmatprep.subr.bf16.mxu0 0
    %998 = vmatpush1.bf16.msra.mxu0 %v737
    %999 = vmatprep.subr.bf16.mxu0 0
    %1000 = vmatpush1.bf16.msra.mxu0 %v740
    %1001 = vmatprep.subr.bf16.mxu0 0
    %1002 = vmatpush1.bf16.msra.mxu0 %v743
    %1003 = vmatprep.subr.bf16.mxu0 0
    %1004 = vmatpush1.bf16.msra.mxu0 %v746
    %1005 = vmatprep.subr.bf16.mxu0 0
    %1006 = vmatpush1.bf16.msra.mxu0 %v749
    %1007 = vmatprep.subr.bf16.mxu0 0
    %1008 = vmatpush1.bf16.msra.mxu0 %v752
    %1009 = vmatprep.subr.bf16.mxu0 0
    %1010 = vmatpush1.bf16.msra.mxu0 %v755
    %1011 = vmatprep.subr.bf16.mxu0 0
    %1012 = vmatpush1.bf16.msra.mxu0 %v758
    %1013 = vmatprep.subr.bf16.mxu0 0
    %1014 = vmatpush1.bf16.msra.mxu0 %v761
    %1015 = vmatprep.subr.bf16.mxu0 0
    %1016 = vmatpush1.bf16.msra.mxu0 %v764
    %1017 = vmatprep.subr.bf16.mxu0 0
    %1018 = vmatpush1.bf16.msra.mxu0 %v767
    %1019 = vmatprep.subr.bf16.mxu0 0
    %1020 = vmatpush1.bf16.msra.mxu0 %v770
    %1021 = vmatprep.mubr.bf16.mxu0 %v209
    %1022 = vmatmul.mubr.bf16.gmra.mrb[0].mxu0 %v208
    %v1023 = vpop.f32.mrb[0].mxu0
    %v1024 = vadd.f32 %v984, %v1023
    %v1025 = vpop.f32.mrb[0].mxu0
    %v1026 = vpop.f32.mrb[0].mxu0
    %v1027 = vpop.f32.mrb[0].mxu0
    %1028 = vdwg.mxu0
    %v1029 = vmax.f32 %v943, 0.0
    %v1030 = vmax.f32 %v945, 0.0
    %v1031 = vmax.f32 %v1024, 0.0
    %v1032 = vpack.c.bf16 %v1029, %v1029
    %v1033 = vpack.c.bf16 %v1030, %v1030
    %v1034 = vpack.c.bf16 %v1031, %v1031
    %v1035 = vld [vmem:[#allocation6] sm:$0xf]
    %v1036 = vld [vmem:[#allocation6 + $0x4] sm:$0xf]
    %v1037 = vld [vmem:[#allocation6 + $0x8] sm:$0xf]
    %v1038 = vld [vmem:[#allocation6 + $0xc] sm:$0xf]
    %v1039 = vld [vmem:[#allocation6 + $0x10] sm:$0xf]
    %v1040 = vld [vmem:[#allocation6 + $0x14] sm:$0xf]
    %v1041 = vld [vmem:[#allocation6 + $0x18] sm:$0xf]
    %v1042 = vld [vmem:[#allocation6 + $0x1c] sm:$0xf]
    %v1043 = vld [vmem:[#allocation6 + $0x20] sm:$0xf]
    %v1044 = vld [vmem:[#allocation6 + $0x24] sm:$0xf]
    %v1045 = vld [vmem:[#allocation6 + $0x28] sm:$0xf]
    %v1046 = vld [vmem:[#allocation6 + $0x2c] sm:$0xf]
    %v1047 = vld [vmem:[#allocation6 + $0x30] sm:$0xf]
    %v1048 = vld [vmem:[#allocation6 + $0x34] sm:$0xf]
    %v1049 = vld [vmem:[#allocation6 + $0x38] sm:$0xf]
    %v1050 = vld [vmem:[#allocation6 + $0x3c] sm:$0xf]
    %v1051 = vld [vmem:[#allocation6 + $0x40] sm:$0xf]
    %v1052 = vld [vmem:[#allocation6 + $0x44] sm:$0xf]
    %v1053 = vld [vmem:[#allocation6 + $0x48] sm:$0xf]
    %v1054 = vld [vmem:[#allocation6 + $0x4c] sm:$0xf]
    %v1055 = vld [vmem:[#allocation6 + $0x50] sm:$0xf]
    %v1056 = vld [vmem:[#allocation6 + $0x54] sm:$0xf]
    %v1057 = vld [vmem:[#allocation6 + $0x58] sm:$0xf]
    %v1058 = vld [vmem:[#allocation6 + $0x5c] sm:$0xf]
    %v1059 = vld [vmem:[#allocation6 + $0x60] sm:$0xf]
    %v1060 = vld [vmem:[#allocation6 + $0x64] sm:$0xf]
    %v1061 = vld [vmem:[#allocation6 + $0x68] sm:$0xf]
    %v1062 = vld [vmem:[#allocation6 + $0x6c] sm:$0xf]
    %v1063 = vld [vmem:[#allocation6 + $0x70] sm:$0xf]
    %v1064 = vld [vmem:[#allocation6 + $0x74] sm:$0xf]
    %v1065 = vld [vmem:[#allocation6 + $0x78] sm:$0xf]
    %v1066 = vld [vmem:[#allocation6 + $0x7c] sm:$0xf]
    %v1067 = vld [vmem:[#allocation6 + $0x80] sm:$0xf]
    %v1068 = vld [vmem:[#allocation6 + $0x84] sm:$0xf]
    %v1069 = vld [vmem:[#allocation6 + $0x88] sm:$0xf]
    %v1070 = vld [vmem:[#allocation6 + $0x8c] sm:$0xf]
    %v1071 = vld [vmem:[#allocation6 + $0x90] sm:$0xf]
    %v1072 = vld [vmem:[#allocation6 + $0x94] sm:$0xf]
    %v1073 = vld [vmem:[#allocation6 + $0x98] sm:$0xf]
    %v1074 = vld [vmem:[#allocation6 + $0x9c] sm:$0xf]
    %v1075 = vld [vmem:[#allocation6 + $0xa0] sm:$0xf]
    %v1076 = vld [vmem:[#allocation6 + $0xa4] sm:$0xf]
    %v1077 = vld [vmem:[#allocation6 + $0xa8] sm:$0xf]
    %v1078 = vld [vmem:[#allocation6 + $0xac] sm:$0xf]
    %v1079 = vld [vmem:[#allocation6 + $0xb0] sm:$0xf]
    %v1080 = vld [vmem:[#allocation6 + $0xb4] sm:$0xf]
    %v1081 = vld [vmem:[#allocation6 + $0xb8] sm:$0xf]
    %v1082 = vld [vmem:[#allocation6 + $0xbc] sm:$0xf]
    %v1083 = vld [vmem:[%s6] sm:$0x1]
    %v1085 = vlaneseq
    %v1086 = vshrl.u32 %v1085, 7
    %v1087 = vsub.s32 0, %v1086
    %v1088 = vrot.slane %v1083, %v1087
    %v1138 = vunpack.c.l.b16 %v1035
    %v1139 = vunpack.c.l.b16 %v1036
    %v1140 = vunpack.c.l.b16 %v1037
    %v1141 = vunpack.c.l.b16 %v1038
    %v1142 = vunpack.c.l.b16 %v1039
    %v1143 = vunpack.c.l.b16 %v1040
    %v1144 = vunpack.c.l.b16 %v1041
    %v1145 = vunpack.c.l.b16 %v1042
    %v1146 = vunpack.c.l.b16 %v1043
    %v1147 = vunpack.c.l.b16 %v1044
    %v1148 = vunpack.c.l.b16 %v1045
    %v1149 = vunpack.c.l.b16 %v1046
    %v1150 = vunpack.c.l.b16 %v1047
    %v1151 = vunpack.c.l.b16 %v1048
    %v1152 = vunpack.c.l.b16 %v1049
    %v1153 = vunpack.c.l.b16 %v1050
    %v1154 = vunpack.c.l.b16 %v1051
    %v1155 = vunpack.c.l.b16 %v1052
    %v1156 = vunpack.c.l.b16 %v1053
    %v1157 = vunpack.c.l.b16 %v1054
    %v1158 = vunpack.c.l.b16 %v1055
    %v1159 = vunpack.c.l.b16 %v1056
    %v1160 = vunpack.c.l.b16 %v1057
    %v1161 = vunpack.c.l.b16 %v1058
    %v1162 = vunpack.c.l.b16 %v1059
    %v1163 = vunpack.c.l.b16 %v1060
    %v1164 = vunpack.c.l.b16 %v1061
    %v1165 = vunpack.c.l.b16 %v1062
    %v1166 = vunpack.c.l.b16 %v1063
    %v1167 = vunpack.c.l.b16 %v1064
    %v1168 = vunpack.c.l.b16 %v1065
    %v1169 = vunpack.c.l.b16 %v1066
    %v1170 = vunpack.c.l.b16 %v1067
    %v1171 = vunpack.c.l.b16 %v1068
    %v1172 = vunpack.c.l.b16 %v1069
    %v1173 = vunpack.c.l.b16 %v1070
    %v1174 = vunpack.c.l.b16 %v1071
    %v1175 = vunpack.c.l.b16 %v1072
    %v1176 = vunpack.c.l.b16 %v1073
    %v1177 = vunpack.c.l.b16 %v1074
    %v1178 = vunpack.c.l.b16 %v1075
    %v1179 = vunpack.c.l.b16 %v1076
    %v1180 = vunpack.c.l.b16 %v1077
    %v1181 = vunpack.c.l.b16 %v1078
    %v1182 = vunpack.c.l.b16 %v1079
    %v1183 = vunpack.c.l.b16 %v1080
    %v1184 = vunpack.c.l.b16 %v1081
    %v1185 = vunpack.c.l.b16 %v1082
    %v1186 = vpack.c.b16 %v1139, %v1138
    %v1187 = vpack.c.b16 %v1141, %v1140
    %v1188 = vpack.c.b16 %v1143, %v1142
    %v1189 = vpack.c.b16 %v1145, %v1144
    %v1190 = vpack.c.b16 %v1147, %v1146
    %v1191 = vpack.c.b16 %v1149, %v1148
    %v1192 = vpack.c.b16 %v1151, %v1150
    %v1193 = vpack.c.b16 %v1153, %v1152
    %v1194 = vpack.c.b16 %v1155, %v1154
    %v1195 = vpack.c.b16 %v1157, %v1156
    %v1196 = vpack.c.b16 %v1159, %v1158
    %v1197 = vpack.c.b16 %v1161, %v1160
    %v1198 = vpack.c.b16 %v1163, %v1162
    %v1199 = vpack.c.b16 %v1165, %v1164
    %v1200 = vpack.c.b16 %v1167, %v1166
    %v1201 = vpack.c.b16 %v1169, %v1168
    %v1202 = vpack.c.b16 %v1171, %v1170
    %v1203 = vpack.c.b16 %v1173, %v1172
    %v1204 = vpack.c.b16 %v1175, %v1174
    %v1205 = vpack.c.b16 %v1177, %v1176
    %v1206 = vpack.c.b16 %v1179, %v1178
    %v1207 = vpack.c.b16 %v1181, %v1180
    %v1208 = vpack.c.b16 %v1183, %v1182
    %v1209 = vpack.c.b16 %v1185, %v1184
    %1234 = vmatprep.subr.bf16.mxu0 0
    %1235 = vmatpush1.bf16.msra.mxu0 %v1186
    %1236 = vmatprep.subr.bf16.mxu0 0
    %1237 = vmatpush1.bf16.msra.mxu0 %v1187
    %1238 = vmatprep.subr.bf16.mxu0 0
    %1239 = vmatpush1.bf16.msra.mxu0 %v1188
    %1240 = vmatprep.subr.bf16.mxu0 0
    %1241 = vmatpush1.bf16.msra.mxu0 %v1189
    %1242 = vmatprep.subr.bf16.mxu0 0
    %1243 = vmatpush1.bf16.msra.mxu0 %v1190
    %1244 = vmatprep.subr.bf16.mxu0 0
    %1245 = vmatpush1.bf16.msra.mxu0 %v1191
    %1246 = vmatprep.subr.bf16.mxu0 0
    %1247 = vmatpush1.bf16.msra.mxu0 %v1192
    %1248 = vmatprep.subr.bf16.mxu0 0
    %1249 = vmatpush1.bf16.msra.mxu0 %v1193
    %1250 = vmatprep.subr.bf16.mxu0 0
    %1251 = vmatpush1.bf16.msra.mxu0 %v1194
    %1252 = vmatprep.subr.bf16.mxu0 0
    %1253 = vmatpush1.bf16.msra.mxu0 %v1195
    %1254 = vmatprep.subr.bf16.mxu0 0
    %1255 = vmatpush1.bf16.msra.mxu0 %v1196
    %1256 = vmatprep.subr.bf16.mxu0 0
    %1257 = vmatpush1.bf16.msra.mxu0 %v1197
    %1258 = vmatprep.subr.bf16.mxu0 0
    %1259 = vmatpush1.bf16.msra.mxu0 %v1198
    %1260 = vmatprep.subr.bf16.mxu0 0
    %1261 = vmatpush1.bf16.msra.mxu0 %v1199
    %1262 = vmatprep.subr.bf16.mxu0 0
    %1263 = vmatpush1.bf16.msra.mxu0 %v1200
    %1264 = vmatprep.subr.bf16.mxu0 0
    %1265 = vmatpush1.bf16.msra.mxu0 %v1201
    %1266 = vmatprep.mubr.bf16.mxu0 %v1033
    %1267 = vmatmul.mubr.bf16.gmra.mrb[0].mxu0 %v1032
    %v1268 = vpop.f32.mrb[0].mxu0
    %v1269 = vadd.f32 %v1088, %v1268
    %v1270 = vpop.f32.mrb[0].mxu0
    %v1271 = vpop.f32.mrb[0].mxu0
    %v1272 = vpop.f32.mrb[0].mxu0
    %1273 = vdwg.mxu0
    %1274 = vmatprep.subr.bf16.mxu0 0
    %1275 = vmatpush1.bf16.msra.mxu0 %v1202
    %1276 = vmatprep.subr.bf16.mxu0 0
    %1277 = vmatpush1.bf16.msra.mxu0 %v1203
    %1278 = vmatprep.subr.bf16.mxu0 0
    %1279 = vmatpush1.bf16.msra.mxu0 %v1204
    %1280 = vmatprep.subr.bf16.mxu0 0
    %1281 = vmatpush1.bf16.msra.mxu0 %v1205
    %1282 = vmatprep.subr.bf16.mxu0 0
    %1283 = vmatpush1.bf16.msra.mxu0 %v1206
    %1284 = vmatprep.subr.bf16.mxu0 0
    %1285 = vmatpush1.bf16.msra.mxu0 %v1207
    %1286 = vmatprep.subr.bf16.mxu0 0
    %1287 = vmatpush1.bf16.msra.mxu0 %v1208
    %1288 = vmatprep.subr.bf16.mxu0 0
    %1289 = vmatpush1.bf16.msra.mxu0 %v1209
    %1290 = vmatprep.subr.bf16.mxu0 0
    %1291 = vmatpush1.bf16.msra.mxu0 0
    %1292 = vmatprep.subr.bf16.mxu0 0
    %1293 = vmatpush1.bf16.msra.mxu0 0
    %1294 = vmatprep.subr.bf16.mxu0 0
    %1295 = vmatpush1.bf16.msra.mxu0 0
    %1296 = vmatprep.subr.bf16.mxu0 0
    %1297 = vmatpush1.bf16.msra.mxu0 0
    %1298 = vmatprep.subr.bf16.mxu0 0
    %1299 = vmatpush1.bf16.msra.mxu0 0
    %1300 = vmatprep.subr.bf16.mxu0 0
    %1301 = vmatpush1.bf16.msra.mxu0 0
    %1302 = vmatprep.subr.bf16.mxu0 0
    %1303 = vmatpush1.bf16.msra.mxu0 0
    %1304 = vmatprep.subr.bf16.mxu0 0
    %1305 = vmatpush1.bf16.msra.mxu0 0
    %1306 = vmatprep.mubr.bf16.mxu0 0
    %1307 = vmatmul.mubr.bf16.gmra.mrb[0].mxu0 %v1034
    %v1308 = vpop.f32.mrb[0].mxu0
    %v1309 = vadd.f32 %v1269, %v1308
    %v1310 = vpop.f32.mrb[0].mxu0
    %v1311 = vpop.f32.mrb[0].mxu0
    %v1312 = vpop.f32.mrb[0].mxu0
    %1313 = vdwg.mxu0
    %v1314 = vtanh.pop %v1309
    %v1315 = vmul.f32 %v1314, 2.0
    %1316 = vst [vmem:[%s7] sm:$0xff] %v1315
    // Predicated region
    $region42: #{actor_forward.1} parent=1 // pred_check
      _
    $region43: #{actor_forward.1} parent=1 // pred_check_branch
      %1318 = sbr.rel (0) target = $region45
    $region44: #{actor_forward.1} parent=1 // pred_region
      _
    $region45: #{actor_forward.1} parent=1 // pred_fallthru
      _
    // Predicated region
    $region46: #{actor_forward.1} parent=1 // pred_check
      _
    $region47: #{actor_forward.1} parent=1 // pred_check_branch
      %1320 = sbr.rel (0) target = $region49
    $region48: #{actor_forward.1} parent=1 // pred_region
      _
    $region49: #{actor_forward.1} parent=1 // pred_fallthru
      _
    %1321 = vsyncpa [#allocation3], 1
    %1322 = vsyncpa [#allocation5], 1

</llo_original>
